<compile_context>
chip_gen: v7x
topology: tpu7x:2x2x1
jax: 0.10.0
libtpu: 0.0.40
codegen_flags: <defaults>
</compile_context>

<pallas_src>
import functools

import jax
import jax.numpy as jnp
from jax.experimental import pallas as pl
from jax.experimental.pallas import tpu as pltpu


# ---------------------------------------------------------------------------
# Fused SE3 layer kernel:  y = norm_bias_relu( A @ (h @ W1) + h @ W2 )
# Activation layout: [3, N, C]  (xyz component, node, channel).
# ---------------------------------------------------------------------------
def _se3_layer_kernel(x_ref, a_ref, w1_ref, w2_ref, b_ref, o_ref, *, row_tile):
    # x_ref : (3, N, C_in)        full activations (stationary across grid)
    # a_ref : (row_tile, N)       row tile of row-normalized adjacency
    # w1_ref: (C_in, C_out)       folded aggregation weight
    # w2_ref: (C_in, C_out)       folded self-interaction + skip weight
    # b_ref : (1, C_out)          GNormBias bias
    # o_ref : (3, row_tile, C_out)
    i = pl.program_id(0)
    r0 = pl.multiple_of(i * row_tile, row_tile)

    a = a_ref[...]
    w1 = w1_ref[...]
    w2 = w2_ref[...]

    ys = []
    for c in range(3):                               # static unroll over xyz
        xc = x_ref[c]                                # (N, C_in)
        x_t = x_ref[c, pl.ds(r0, row_tile), :]       # (row_tile, C_in)
        agg = jnp.dot(a, xc, preferred_element_type=jnp.float32)      # (rt, C_in)
        y = (jnp.dot(agg, w1, preferred_element_type=jnp.float32)
             + jnp.dot(x_t, w2, preferred_element_type=jnp.float32))  # (rt, C_out)
        ys.append(y)

    # GNormBias-style equivariant nonlinearity: scale by relu(|y| + b) / |y|.
    sumsq = ys[0] * ys[0] + ys[1] * ys[1] + ys[2] * ys[2]      # (rt, C_out)
    inv = jax.lax.rsqrt(sumsq + 1e-12)                         # EUP
    nrm = sumsq * inv
    scale = jnp.maximum(nrm + b_ref[...], 0.0) * inv
    for c in range(3):
        o_ref[c] = (ys[c] * scale).astype(o_ref.dtype)


def se3_layer(x, A, W1, W2, bias, *, row_tile=None):
    """One fused SE3 layer. x: [3, N, C_in] -> [3, N, C_out]."""
    _, N, C_in = x.shape
    C_out = W1.shape[1]
    if row_tile is None:
        # Full-array block for small graphs; multiple-of-8 row tiles at scale
        # (gives a >1-extent "parallel" grid axis for v7x's two TensorCores).
        row_tile = N if (N <= 256 or N % 256 != 0) else 256
    assert N % row_tile == 0
    b = bias.reshape(1, C_out).astype(jnp.float32)
    return pl.pallas_call(
        functools.partial(_se3_layer_kernel, row_tile=row_tile),
        out_shape=jax.ShapeDtypeStruct((3, N, C_out), jnp.float32),
        grid_spec=pltpu.PrefetchScalarGridSpec(
            num_scalar_prefetch=0,
            grid=(N // row_tile,),
            in_specs=[
                pl.BlockSpec((3, N, C_in), lambda i: (0, 0, 0)),   # stationary
                pl.BlockSpec((row_tile, N), lambda i: (i, 0)),
                pl.BlockSpec((C_in, C_out), lambda i: (0, 0)),
                pl.BlockSpec((C_in, C_out), lambda i: (0, 0)),
                pl.BlockSpec((1, C_out), lambda i: (0, 0)),
            ],
            out_specs=pl.BlockSpec((3, row_tile, C_out), lambda i: (0, i, 0)),
        ),
        compiler_params=pltpu.CompilerParams(
            dimension_semantics=("parallel",)),
    )(x.astype(jnp.float32), A.astype(jnp.float32),
      W1.astype(jnp.float32), W2.astype(jnp.float32), b)


# ---------------------------------------------------------------------------
# Final MLP kernel: relu(x @ W), no padding, full-extent weight block.
# ---------------------------------------------------------------------------
def _mlp_relu_kernel(x_ref, w_ref, o_ref):
    y = jnp.dot(x_ref[...], w_ref[...], preferred_element_type=jnp.float32)
    o_ref[...] = jnp.maximum(y, 0.0).astype(o_ref.dtype)


def mlp_relu(x, W, *, row_tile=None):
    M, K = x.shape
    _, Nf = W.shape
    if row_tile is None:
        row_tile = M if (M <= 512 or M % 256 != 0) else 256
    assert M % row_tile == 0
    return pl.pallas_call(
        _mlp_relu_kernel,
        out_shape=jax.ShapeDtypeStruct((M, Nf), jnp.float32),
        grid_spec=pltpu.PrefetchScalarGridSpec(
            num_scalar_prefetch=0,
            grid=(M // row_tile,),
            in_specs=[pl.BlockSpec((row_tile, K), lambda i: (i, 0)),
                      pl.BlockSpec((K, Nf), lambda i: (0, 0))],   # stationary W
            out_specs=pl.BlockSpec((row_tile, Nf), lambda i: (i, 0)),
        ),
        compiler_params=pltpu.CompilerParams(
            dimension_semantics=("parallel",)),
    )(x.astype(jnp.float32), W.astype(jnp.float32))


# ---------------------------------------------------------------------------
# SE(3)-equivariant building blocks (glue around the fused kernel)
# ---------------------------------------------------------------------------
def se3_conv_block(h, A, block_params):
    """SE3ConvBlock: num_layers x (GSE3Res-approx + GNormBias-approx)."""
    # TODO(synk): full GSE3Res SE(3) attention with spherical-harmonic basis
    # (get_basis_and_r) is not available; approximated with equivariant value
    # projection + normalized graph aggregation + self-interaction + 'cat'
    # skip, with the skip folded algebraically into W1/W2.
    for lp in block_params:
        C_out = lp['W_v'].shape[1]
        W_cat_top = lp['W_cat'][:C_out]
        W_cat_bot = lp['W_cat'][C_out:]
        W1 = lp['W_v'] @ W_cat_top                      # tiny CxC folds (XLA)
        W2 = lp['W_self'] @ W_cat_top + W_cat_bot
        h = se3_layer(h, A, W1, W2, lp['bias'])
    return h


def pooling3d(h, A, ratio, aggr):
    # TODO(synk): real Pooling3D uses farthest-point sampling on 3D coords;
    # strided consecutive grouping is used here.
    # (aggr='max' on raw vector components breaks exact SE(3) equivariance;
    #  'mean' is the equivariant choice.)
    _, N, C = h.shape
    k = int(round(1.0 / ratio))
    Np = N // k
    fp_idx = jnp.arange(N) // k
    hg = h.reshape(3, Np, k, C)
    h_p = hg.mean(axis=2) if aggr == 'mean' else hg.max(axis=2)
    # Coarsened adjacency via block-sum (segment reduction), no dense S matmuls.
    A_p = A.reshape(Np, k, Np, k).sum(axis=(1, 3))
    A_p = A_p / jnp.maximum(A_p.sum(-1, keepdims=True), 1e-6)
    return h_p, A_p, fp_idx


def upsampling3d(h_p, fp_idx):
    # TODO(synk): Upsampling3D interpolation replaced by parent-index gather.
    return h_p[:, fp_idx, :]


# ---------------------------------------------------------------------------
# SE3Unet forward
# ---------------------------------------------------------------------------
def se3_unet_forward(params, v, A, batch_size):
    """v: [N, 1, 3] input type-1 features (G.ndata['v']); A: [N, N] adjacency."""
    # canonical activation layout: [3, N, C]; transpose only at entry / exit.
    h = jnp.transpose(v.astype(jnp.float32), (2, 0, 1))     # (3, N, 1)
    res = []
    # down branch
    for lvl in range(params['n_layers']):
        h = se3_conv_block(h, A, params['down'][lvl])
        h_p, A_p, fp_idx = pooling3d(h, A, params['pooling_ratio'], params['aggr'])
        res.append((h, A, fp_idx))
        h, A = h_p, A_p
    # bottleneck
    h = se3_conv_block(h, A, params['bottleneck'])
    # up branch
    for lvl in range(params['n_layers']):
        h_res, A_res, fp_idx = res[-1 - lvl]
        h = upsampling3d(h, fp_idx) + h_res                  # residual skip add
        h = se3_conv_block(h, A_res, params['up'][lvl])
        A = A_res
    # final MLP: view(-1, N//batch, in_features) -> Linear(no bias) -> ReLU
    # (assumes the last up block outputs exactly 1 channel so [N,1,3] -> [N,3])
    assert h.shape[2] == 1
    N = h.shape[1]
    x = jnp.transpose(h[:, :, 0], (1, 0))                    # (N, 3) = (N, in_features)
    y = mlp_relu(x, params['W_mlp'])
    return y.reshape(batch_size, N // batch_size, params['W_mlp'].shape[1])


# ---------------------------------------------------------------------------
# Deterministic parameter init
# ---------------------------------------------------------------------------
def init_block(key, c_in, c_out, num_layers=2):
    layers = []
    cin = c_in
    for _ in range(num_layers):
        key, k1, k2, k3, k4 = jax.random.split(key, 5)
        layers.append({
            'W_v': jax.random.normal(k1, (cin, c_out), jnp.float32) / jnp.sqrt(cin),
            'W_self': jax.random.normal(k2, (cin, c_out), jnp.float32) / jnp.sqrt(cin),
            'W_cat': jax.random.normal(k3, (c_out + cin, c_out), jnp.float32)
                     / jnp.sqrt(c_out + cin),
            'bias': 0.1 * jax.random.normal(k4, (c_out,), jnp.float32),
        })
        cin = c_out
    return layers, key


def build_adjacency(n_nodes, batch_size):
    """Per-graph ring + self-loops, row-normalized (batched as block-diagonal)."""
    npb = n_nodes // batch_size
    A = jnp.zeros((n_nodes, n_nodes), jnp.float32)
    idx = jnp.arange(npb)
    for b in range(batch_size):
        off = b * npb
        A = A.at[off + idx, off + idx].set(1.0)
        A = A.at[off + idx, off + (idx + 1) % npb].set(1.0)
        A = A.at[off + idx, off + (idx - 1) % npb].set(1.0)
    return A / A.sum(-1, keepdims=True)


if __name__ == "__main__":
    key = jax.random.PRNGKey(0)

    # small config consistent with SE3Unet.__init__
    n_layers = 2
    hidden_channels = 4
    in_features = 3            # type-1 feature has 3 components, 1 channel at output
    out_features = 8
    pooling_ratio = 0.5
    aggr = 'mean'
    batch_size = 2
    n_nodes = 16               # 8 nodes per graph

    # down branch: SE3ConvBlock(in=1 -> hidden), then (hidden -> hidden)
    down = []
    cin = 1
    for _ in range(n_layers):
        blk, key = init_block(key, cin, hidden_channels)
        down.append(blk)
        cin = hidden_channels
    # bottleneck
    bottleneck, key = init_block(key, cin, hidden_channels)
    # up branch: (n_layers - 1) blocks hidden->hidden, final block hidden->1
    up = []
    for _ in range(n_layers - 1):
        blk, key = init_block(key, cin, hidden_channels)
        up.append(blk)
    blk, key = init_block(key, cin, 1)
    up.append(blk)
    # final MLP: Linear(in_features, out_features, bias=False) + ReLU
    key, kmlp, kv = jax.random.split(key, 3)
    W_mlp = jax.random.normal(kmlp, (in_features, out_features), jnp.float32) \
            / jnp.sqrt(in_features)

    params = {
        'n_layers': n_layers,
        'in_features': in_features,
        'pooling_ratio': pooling_ratio,
        'aggr': aggr,
        'down': down,
        'bottleneck': bottleneck,
        'up': up,
        'W_mlp': W_mlp,
    }

    v = jax.random.normal(kv, (n_nodes, 1, 3), jnp.float32)   # G.ndata['v']
    A = build_adjacency(n_nodes, batch_size)

    y_hat = se3_unet_forward(params, v, A, batch_size)
    jax.block_until_ready(y_hat)
    assert y_hat.shape == (batch_size, n_nodes // batch_size, out_features)
    print("KERNEL_OK")
</pallas_src>

<mosaic_0001>
module attributes {stable_mosaic.version = 11 : i64} {
  func.func @_se3_layer_kernel(%arg0: i32, %arg1: memref<3x16x1xf32, #tpu.memory_space<vmem>>, %arg2: memref<16x16xf32, #tpu.memory_space<vmem>>, %arg3: memref<1x4xf32, #tpu.memory_space<vmem>>, %arg4: memref<1x4xf32, #tpu.memory_space<vmem>>, %arg5: memref<1x4xf32, #tpu.memory_space<vmem>>, %arg6: memref<3x16x4xf32, #tpu.memory_space<vmem>>) attributes {dimension_semantics = [#tpu.dimension_semantics<parallel>], iteration_bounds = array<i64: 1>, scalar_prefetch = 0 : i64, scratch_operands = 0 : i64, tpu.core_type = #tpu.core_type<tc>, window_params = [{pipeline_mode = #tpu.pipeline_mode<synchronous>, transform_indices = @transform_0, window_bounds = array<i64: 3, 16, 1>}, {transform_indices = @transform_1, window_bounds = array<i64: 16, 16>}, {pipeline_mode = #tpu.pipeline_mode<synchronous>, transform_indices = @transform_2, window_bounds = array<i64: 1, 4>}, {pipeline_mode = #tpu.pipeline_mode<synchronous>, transform_indices = @transform_3, window_bounds = array<i64: 1, 4>}, {pipeline_mode = #tpu.pipeline_mode<synchronous>, transform_indices = @transform_4, window_bounds = array<i64: 1, 4>}, {transform_indices = @transform_5, window_bounds = array<i64: 3, 16, 4>}]} {
    %c16_i32 = arith.constant 16 : i32
    %0 = arith.muli %arg0, %c16_i32 : i32
    %1 = tpu.assume_multiple %0, 16 : i32
    %c0 = arith.constant 0 : index
    %c0_0 = arith.constant 0 : index
    %2 = vector.load %arg2[%c0, %c0_0] : memref<16x16xf32, #tpu.memory_space<vmem>>, vector<16x16xf32>
    %c0_1 = arith.constant 0 : index
    %c0_2 = arith.constant 0 : index
    %3 = vector.load %arg3[%c0_1, %c0_2] : memref<1x4xf32, #tpu.memory_space<vmem>>, vector<1x4xf32>
    %c0_3 = arith.constant 0 : index
    %c0_4 = arith.constant 0 : index
    %4 = vector.load %arg4[%c0_3, %c0_4] : memref<1x4xf32, #tpu.memory_space<vmem>>, vector<1x4xf32>
    %c0_5 = arith.constant 0 : index
    %c0_6 = arith.constant 0 : index
    %c0_7 = arith.constant 0 : index
    %5 = vector.load %arg1[%c0_5, %c0_6, %c0_7] : memref<3x16x1xf32, #tpu.memory_space<vmem>>, vector<1x16x1xf32>
    %6 = vector.shape_cast %5 : vector<1x16x1xf32> to vector<16x1xf32>
    %c0_8 = arith.constant 0 : index
    %7 = arith.index_cast %1 : i32 to index
    %c0_9 = arith.constant 0 : index
    %8 = vector.load %arg1[%c0_8, %7, %c0_9] : memref<3x16x1xf32, #tpu.memory_space<vmem>>, vector<1x16x1xf32>
    %9 = vector.shape_cast %8 : vector<1x16x1xf32> to vector<16x1xf32>
    %cst = arith.constant dense<0.000000e+00> : vector<16x1xf32>
    %10 = tpu.matmul %2, %6, %cst {dimension_numbers = #tpu.dot_dimension_numbers<[1], [0], [0], [1], [0, 0, 1, 1], [], []>} : vector<16x16xf32>, vector<16x1xf32>, vector<16x1xf32> -> vector<16x1xf32>
    %cst_10 = arith.constant dense<0.000000e+00> : vector<16x4xf32>
    %11 = tpu.matmul %10, %3, %cst_10 {dimension_numbers = #tpu.dot_dimension_numbers<[1], [0], [0], [1], [0, 0, 1, 1], [], []>} : vector<16x1xf32>, vector<1x4xf32>, vector<16x4xf32> -> vector<16x4xf32>
    %cst_11 = arith.constant dense<0.000000e+00> : vector<16x4xf32>
    %12 = tpu.matmul %9, %4, %cst_11 {dimension_numbers = #tpu.dot_dimension_numbers<[1], [0], [0], [1], [0, 0, 1, 1], [], []>} : vector<16x1xf32>, vector<1x4xf32>, vector<16x4xf32> -> vector<16x4xf32>
    %13 = arith.addf %11, %12 : vector<16x4xf32>
    %c1 = arith.constant 1 : index
    %c0_12 = arith.constant 0 : index
    %c0_13 = arith.constant 0 : index
    %14 = vector.load %arg1[%c1, %c0_12, %c0_13] : memref<3x16x1xf32, #tpu.memory_space<vmem>>, vector<1x16x1xf32>
    %15 = vector.shape_cast %14 : vector<1x16x1xf32> to vector<16x1xf32>
    %c1_14 = arith.constant 1 : index
    %16 = arith.index_cast %1 : i32 to index
    %c0_15 = arith.constant 0 : index
    %17 = vector.load %arg1[%c1_14, %16, %c0_15] : memref<3x16x1xf32, #tpu.memory_space<vmem>>, vector<1x16x1xf32>
    %18 = vector.shape_cast %17 : vector<1x16x1xf32> to vector<16x1xf32>
    %cst_16 = arith.constant dense<0.000000e+00> : vector<16x1xf32>
    %19 = tpu.matmul %2, %15, %cst_16 {dimension_numbers = #tpu.dot_dimension_numbers<[1], [0], [0], [1], [0, 0, 1, 1], [], []>} : vector<16x16xf32>, vector<16x1xf32>, vector<16x1xf32> -> vector<16x1xf32>
    %cst_17 = arith.constant dense<0.000000e+00> : vector<16x4xf32>
    %20 = tpu.matmul %19, %3, %cst_17 {dimension_numbers = #tpu.dot_dimension_numbers<[1], [0], [0], [1], [0, 0, 1, 1], [], []>} : vector<16x1xf32>, vector<1x4xf32>, vector<16x4xf32> -> vector<16x4xf32>
    %cst_18 = arith.constant dense<0.000000e+00> : vector<16x4xf32>
    %21 = tpu.matmul %18, %4, %cst_18 {dimension_numbers = #tpu.dot_dimension_numbers<[1], [0], [0], [1], [0, 0, 1, 1], [], []>} : vector<16x1xf32>, vector<1x4xf32>, vector<16x4xf32> -> vector<16x4xf32>
    %22 = arith.addf %20, %21 : vector<16x4xf32>
    %c2 = arith.constant 2 : index
    %c0_19 = arith.constant 0 : index
    %c0_20 = arith.constant 0 : index
    %23 = vector.load %arg1[%c2, %c0_19, %c0_20] : memref<3x16x1xf32, #tpu.memory_space<vmem>>, vector<1x16x1xf32>
    %24 = vector.shape_cast %23 : vector<1x16x1xf32> to vector<16x1xf32>
    %c2_21 = arith.constant 2 : index
    %25 = arith.index_cast %1 : i32 to index
    %c0_22 = arith.constant 0 : index
    %26 = vector.load %arg1[%c2_21, %25, %c0_22] : memref<3x16x1xf32, #tpu.memory_space<vmem>>, vector<1x16x1xf32>
    %27 = vector.shape_cast %26 : vector<1x16x1xf32> to vector<16x1xf32>
    %cst_23 = arith.constant dense<0.000000e+00> : vector<16x1xf32>
    %28 = tpu.matmul %2, %24, %cst_23 {dimension_numbers = #tpu.dot_dimension_numbers<[1], [0], [0], [1], [0, 0, 1, 1], [], []>} : vector<16x16xf32>, vector<16x1xf32>, vector<16x1xf32> -> vector<16x1xf32>
    %cst_24 = arith.constant dense<0.000000e+00> : vector<16x4xf32>
    %29 = tpu.matmul %28, %3, %cst_24 {dimension_numbers = #tpu.dot_dimension_numbers<[1], [0], [0], [1], [0, 0, 1, 1], [], []>} : vector<16x1xf32>, vector<1x4xf32>, vector<16x4xf32> -> vector<16x4xf32>
    %cst_25 = arith.constant dense<0.000000e+00> : vector<16x4xf32>
    %30 = tpu.matmul %27, %4, %cst_25 {dimension_numbers = #tpu.dot_dimension_numbers<[1], [0], [0], [1], [0, 0, 1, 1], [], []>} : vector<16x1xf32>, vector<1x4xf32>, vector<16x4xf32> -> vector<16x4xf32>
    %31 = arith.addf %29, %30 : vector<16x4xf32>
    %32 = arith.mulf %13, %13 : vector<16x4xf32>
    %33 = arith.mulf %22, %22 : vector<16x4xf32>
    %34 = arith.addf %32, %33 : vector<16x4xf32>
    %35 = arith.mulf %31, %31 : vector<16x4xf32>
    %36 = arith.addf %34, %35 : vector<16x4xf32>
    %cst_26 = arith.constant 9.99999996E-13 : f32
    %37 = vector.broadcast %cst_26 : f32 to vector<16x4xf32>
    %38 = arith.addf %36, %37 : vector<16x4xf32>
    %39 = math.rsqrt %38 : vector<16x4xf32>
    %40 = arith.mulf %36, %39 : vector<16x4xf32>
    %c0_27 = arith.constant 0 : index
    %c0_28 = arith.constant 0 : index
    %41 = vector.load %arg5[%c0_27, %c0_28] : memref<1x4xf32, #tpu.memory_space<vmem>>, vector<1x4xf32>
    %42 = vector.broadcast %41 : vector<1x4xf32> to vector<16x4xf32>
    %43 = arith.addf %40, %42 : vector<16x4xf32>
    %cst_29 = arith.constant 0.000000e+00 : f32
    %44 = vector.broadcast %cst_29 : f32 to vector<16x4xf32>
    %45 = arith.maximumf %43, %44 : vector<16x4xf32>
    %46 = arith.mulf %45, %39 : vector<16x4xf32>
    %47 = arith.mulf %13, %46 : vector<16x4xf32>
    %c0_30 = arith.constant 0 : index
    %c0_31 = arith.constant 0 : index
    %c0_32 = arith.constant 0 : index
    %48 = vector.load %arg6[%c0_30, %c0_31, %c0_32] : memref<3x16x4xf32, #tpu.memory_space<vmem>>, vector<1x16x4xf32>
    %49 = vector.shape_cast %48 : vector<1x16x4xf32> to vector<16x4xf32>
    %50 = vector.shape_cast %47 : vector<16x4xf32> to vector<1x16x4xf32>
    tpu.vector_store %arg6[%c0_30, %c0_31, %c0_32], %50 {strides = array<i32>} : memref<3x16x4xf32, #tpu.memory_space<vmem>>, vector<1x16x4xf32>,
    %51 = arith.mulf %22, %46 : vector<16x4xf32>
    %c1_33 = arith.constant 1 : index
    %c0_34 = arith.constant 0 : index
    %c0_35 = arith.constant 0 : index
    %52 = vector.load %arg6[%c1_33, %c0_34, %c0_35] : memref<3x16x4xf32, #tpu.memory_space<vmem>>, vector<1x16x4xf32>
    %53 = vector.shape_cast %52 : vector<1x16x4xf32> to vector<16x4xf32>
    %54 = vector.shape_cast %51 : vector<16x4xf32> to vector<1x16x4xf32>
    tpu.vector_store %arg6[%c1_33, %c0_34, %c0_35], %54 {strides = array<i32>} : memref<3x16x4xf32, #tpu.memory_space<vmem>>, vector<1x16x4xf32>,
    %55 = arith.mulf %31, %46 : vector<16x4xf32>
    %c2_36 = arith.constant 2 : index
    %c0_37 = arith.constant 0 : index
    %c0_38 = arith.constant 0 : index
    %56 = vector.load %arg6[%c2_36, %c0_37, %c0_38] : memref<3x16x4xf32, #tpu.memory_space<vmem>>, vector<1x16x4xf32>
    %57 = vector.shape_cast %56 : vector<1x16x4xf32> to vector<16x4xf32>
    %58 = vector.shape_cast %55 : vector<16x4xf32> to vector<1x16x4xf32>
    tpu.vector_store %arg6[%c2_36, %c0_37, %c0_38], %58 {strides = array<i32>} : memref<3x16x4xf32, #tpu.memory_space<vmem>>, vector<1x16x4xf32>,
    return
  }
  func.func @transform_0(%arg0: i32) -> (i32, i32, i32) {
    %c0_i32 = arith.constant 0 : i32
    %c0_i32_0 = arith.constant 0 : i32
    %c0_i32_1 = arith.constant 0 : i32
    %c0_i32_2 = arith.constant 0 : i32
    return %c0_i32, %c0_i32_0, %c0_i32_1 : i32, i32, i32
  }
  func.func @transform_1(%arg0: i32) -> (i32, i32) {
    %c0_i32 = arith.constant 0 : i32
    %c0_i32_0 = arith.constant 0 : i32
    return %arg0, %c0_i32 : i32, i32
  }
  func.func @transform_2(%arg0: i32) -> (i32, i32) {
    %c0_i32 = arith.constant 0 : i32
    %c0_i32_0 = arith.constant 0 : i32
    %c0_i32_1 = arith.constant 0 : i32
    return %c0_i32, %c0_i32_0 : i32, i32
  }
  func.func @transform_3(%arg0: i32) -> (i32, i32) {
    %c0_i32 = arith.constant 0 : i32
    %c0_i32_0 = arith.constant 0 : i32
    %c0_i32_1 = arith.constant 0 : i32
    return %c0_i32, %c0_i32_0 : i32, i32
  }
  func.func @transform_4(%arg0: i32) -> (i32, i32) {
    %c0_i32 = arith.constant 0 : i32
    %c0_i32_0 = arith.constant 0 : i32
    %c0_i32_1 = arith.constant 0 : i32
    return %c0_i32, %c0_i32_0 : i32, i32
  }
  func.func @transform_5(%arg0: i32) -> (i32, i32, i32) {
    %c0_i32 = arith.constant 0 : i32
    %c0_i32_0 = arith.constant 0 : i32
    %c0_i32_1 = arith.constant 0 : i32
    return %c0_i32, %arg0, %c0_i32_0 : i32, i32, i32
  }
}

</mosaic_0001>

<llo_original>
// kernel: tpu_custom_call.1
$region0: #{tpu_custom_call.1}
  #allocation0 [shape = 'u32[]', space=smem, size = 0x4, offset = 0x4, fixed_abs, tag = 'smem constant byte address 0x4 - core index']
  #allocation1 [shape = 'u32[144,128]{1,0:T(1,128)}', space=vmem, size = 0x12000, scoped, tag = 'internal scratch']
  %s0 = inlined_call_operand.vmem [shape: f32[3,16,1], index: 0, kind: input, shape index: {}]
  %s1 = inlined_call_operand.vmem [shape: f32[16,16], index: 1, kind: input, shape index: {}]
  %s2 = inlined_call_operand.vmem [shape: f32[1,4], index: 2, kind: input, shape index: {}]
  %s3 = inlined_call_operand.vmem [shape: f32[1,4], index: 3, kind: input, shape index: {}]
  %s4 = inlined_call_operand.vmem [shape: f32[1,4], index: 4, kind: input, shape index: {}]
  %s5 = inlined_call_operand.vmem [shape: f32[3,16,4], index: 5, kind: output, shape index: {}]
  %s6 = sld [smem:[#allocation0]]
  $region30: #{tpu_custom_call.1} parent=0
    _
  %s8 = ssub.s32 1, %s6
  %s9 = scalar_select 0, %s8, %s6
  // Predicated region
  $region2: #{tpu_custom_call.1} parent=0 // pred_check
    _
  $region3: #{tpu_custom_call.1} parent=0 // pred_check_branch
    %11 = sbr.rel (0) target = $region5
  $region4: #{tpu_custom_call.1} parent=0 // pred_region
    _
  $region5: #{tpu_custom_call.1} parent=0 // pred_fallthru
    _
  // Predicated region
  $region6: #{tpu_custom_call.1} parent=0 // pred_check
    _
  $region7: #{tpu_custom_call.1} parent=0 // pred_check_branch
    %13 = sbr.rel (0) target = $region9
  $region8: #{tpu_custom_call.1} parent=0 // pred_region
    _
  $region9: #{tpu_custom_call.1} parent=0 // pred_fallthru
    _
  // Predicated region
  $region10: #{tpu_custom_call.1} parent=0 // pred_check
    _
  $region11: #{tpu_custom_call.1} parent=0 // pred_check_branch
    %15 = sbr.rel (0) target = $region13
  $region12: #{tpu_custom_call.1} parent=0 // pred_region
    _
  $region13: #{tpu_custom_call.1} parent=0 // pred_fallthru
    _
  // Predicated region
  $region14: #{tpu_custom_call.1} parent=0 // pred_check
    _
  $region15: #{tpu_custom_call.1} parent=0 // pred_check_branch
    %17 = sbr.rel (0) target = $region17
  $region16: #{tpu_custom_call.1} parent=0 // pred_region
    _
  $region17: #{tpu_custom_call.1} parent=0 // pred_fallthru
    _
  // Predicated region
  $region18: #{tpu_custom_call.1} parent=0 // pred_check
    _
  $region19: #{tpu_custom_call.1} parent=0 // pred_check_branch
    %19 = sbr.rel (0) target = $region21
  $region20: #{tpu_custom_call.1} parent=0 // pred_region
    _
  $region21: #{tpu_custom_call.1} parent=0 // pred_fallthru
    _
  %s20 = smul.u32 0, 16
  %v21 = vld [vmem:[%s1] sm:$0xff]
  %v22 = vld [vmem:[%s1 + $0x8] sm:$0xff]
  %v23 = vld [vmem:[%s2] sm:$0x1]
  %v24 = vld [vmem:[%s3] sm:$0x1]
  %v25 = vld [vmem:[%s0] sm:$0xff]
  %v26 = vld [vmem:[%s0 + $0x8] sm:$0xff]
  %s27 = scalar_lea.vmem %s0, %s20
  %v28 = vld [vmem:[%s27] sm:$0xff]
  %v29 = vld [vmem:[%s27 + $0x8] sm:$0xff]
  %vm30 = vcmask 130048
  %v32 = vsel %vm30, %v21, 0
  %v35 = vsel %vm30, %v22, 0
  %37 = vmatprep.subr.mxu0 0.0
  %38 = vmatpush1.msra.mxu0 %v25
  %39 = vmatprep.subr.mxu0 0.0
  %40 = vmatpush1.msra.mxu0 %v26
  %41 = vmatprep.subr.mxu0 0.0
  %42 = vmatpush1.msra.mxu0 0.0
  %43 = vmatprep.subr.mxu0 0.0
  %44 = vmatpush1.msra.mxu0 0.0
  %45 = vmatprep.subr.mxu0 0.0
  %46 = vmatpush1.msra.mxu0 0.0
  %47 = vmatprep.subr.mxu0 0.0
  %48 = vmatpush1.msra.mxu0 0.0
  %49 = vmatprep.subr.mxu0 0.0
  %50 = vmatpush1.msra.mxu0 0.0
  %51 = vmatprep.subr.mxu0 0.0
  %52 = vmatpush1.msra.mxu0 0.0
  %53 = vmatprep.subr.mxu0 0.0
  %54 = vmatpush1.msra.mxu0 0.0
  %55 = vmatprep.subr.mxu0 0.0
  %56 = vmatpush1.msra.mxu0 0.0
  %57 = vmatprep.subr.mxu0 0.0
  %58 = vmatpush1.msra.mxu0 0.0
  %59 = vmatprep.subr.mxu0 0.0
  %60 = vmatpush1.msra.mxu0 0.0
  %61 = vmatprep.subr.mxu0 0.0
  %62 = vmatpush1.msra.mxu0 0.0
  %63 = vmatprep.subr.mxu0 0.0
  %64 = vmatpush1.msra.mxu0 0.0
  %65 = vmatprep.subr.mxu0 0.0
  %66 = vmatpush1.msra.mxu0 0.0
  %67 = vmatprep.subr.mxu0 0.0
  %68 = vmatpush1.msra.mxu0 0.0
  %69 = vmatprep.subr.mxu0 0.0
  %70 = vmatpush1.msra.mxu0 0.0
  %71 = vmatprep.subr.mxu0 0.0
  %72 = vmatpush1.msra.mxu0 0.0
  %73 = vmatprep.subr.mxu0 0.0
  %74 = vmatpush1.msra.mxu0 0.0
  %75 = vmatprep.subr.mxu0 0.0
  %76 = vmatpush1.msra.mxu0 0.0
  %77 = vmatprep.subr.mxu0 0.0
  %78 = vmatpush1.msra.mxu0 0.0
  %79 = vmatprep.subr.mxu0 0.0
  %80 = vmatpush1.msra.mxu0 0.0
  %81 = vmatprep.subr.mxu0 0.0
  %82 = vmatpush1.msra.mxu0 0.0
  %83 = vmatprep.subr.mxu0 0.0
  %84 = vmatpush1.msra.mxu0 0.0
  %85 = vmatprep.subr.mxu0 0.0
  %86 = vmatpush1.msra.mxu0 0.0
  %87 = vmatprep.subr.mxu0 0.0
  %88 = vmatpush1.msra.mxu0 0.0
  %89 = vmatprep.subr.mxu0 0.0
  %90 = vmatpush1.msra.mxu0 0.0
  %91 = vmatprep.subr.mxu0 0.0
  %92 = vmatpush1.msra.mxu0 0.0
  %93 = vmatprep.subr.mxu0 0.0
  %94 = vmatpush1.msra.mxu0 0.0
  %95 = vmatprep.subr.mxu0 0.0
  %96 = vmatpush1.msra.mxu0 0.0
  %97 = vmatprep.subr.mxu0 0.0
  %98 = vmatpush1.msra.mxu0 0.0
  %99 = vmatprep.subr.mxu0 0.0
  %100 = vmatpush1.msra.mxu0 0.0
  %101 = vmatprep.mubr.f32.mxu0 0.0
  %102 = vmatmul.mubr.f32.gmra.mrb[0].mxu0 %v32
  %v103 = vpop.f32.mrb[0].mxu0
  %v104 = vadd.f32 0.0, %v103
  %v105 = vpop.f32.mrb[0].mxu0
  %106 = vmatprep.mubr.f32.mxu0 0.0
  %107 = vmatmul.mubr.f32.gmra.mrb[0].mxu0 %v35
  %v108 = vpop.f32.mrb[0].mxu0
  %v109 = vadd.f32 0.0, %v108
  %v110 = vpop.f32.mrb[0].mxu0
  %111 = vdwg.mxu0
  %vm112 = vcmask 7168
  %v114 = vsel %vm112, %v28, 0
  %v117 = vsel %vm112, %v29, 0
  %vm119 = vcmask 1040384
  %v121 = vsel %vm119, %v24, 0
  %123 = vmatprep.subr.mxu0 0.0
  %124 = vmatpush1.msra.mxu0 %v121
  %125 = vmatprep.subr.mxu0 0.0
  %126 = vmatpush1.msra.mxu0 0.0
  %127 = vmatprep.subr.mxu0 0.0
  %128 = vmatpush1.msra.mxu0 0.0
  %129 = vmatprep.subr.mxu0 0.0
  %130 = vmatpush1.msra.mxu0 0.0
  %131 = vmatprep.subr.mxu0 0.0
  %132 = vmatpush1.msra.mxu0 0.0
  %133 = vmatprep.subr.mxu0 0.0
  %134 = vmatpush1.msra.mxu0 0.0
  %135 = vmatprep.subr.mxu0 0.0
  %136 = vmatpush1.msra.mxu0 0.0
  %137 = vmatprep.subr.mxu0 0.0
  %138 = vmatpush1.msra.mxu0 0.0
  %139 = vmatprep.subr.mxu0 0.0
  %140 = vmatpush1.msra.mxu0 0.0
  %141 = vmatprep.subr.mxu0 0.0
  %142 = vmatpush1.msra.mxu0 0.0
  %143 = vmatprep.subr.mxu0 0.0
  %144 = vmatpush1.msra.mxu0 0.0
  %145 = vmatprep.subr.mxu0 0.0
  %146 = vmatpush1.msra.mxu0 0.0
  %147 = vmatprep.subr.mxu0 0.0
  %148 = vmatpush1.msra.mxu0 0.0
  %149 = vmatprep.subr.mxu0 0.0
  %150 = vmatpush1.msra.mxu0 0.0
  %151 = vmatprep.subr.mxu0 0.0
  %152 = vmatpush1.msra.mxu0 0.0
  %153 = vmatprep.subr.mxu0 0.0
  %154 = vmatpush1.msra.mxu0 0.0
  %155 = vmatprep.subr.mxu0 0.0
  %156 = vmatpush1.msra.mxu0 0.0
  %157 = vmatprep.subr.mxu0 0.0
  %158 = vmatpush1.msra.mxu0 0.0
  %159 = vmatprep.subr.mxu0 0.0
  %160 = vmatpush1.msra.mxu0 0.0
  %161 = vmatprep.subr.mxu0 0.0
  %162 = vmatpush1.msra.mxu0 0.0
  %163 = vmatprep.subr.mxu0 0.0
  %164 = vmatpush1.msra.mxu0 0.0
  %165 = vmatprep.subr.mxu0 0.0
  %166 = vmatpush1.msra.mxu0 0.0
  %167 = vmatprep.subr.mxu0 0.0
  %168 = vmatpush1.msra.mxu0 0.0
  %169 = vmatprep.subr.mxu0 0.0
  %170 = vmatpush1.msra.mxu0 0.0
  %171 = vmatprep.subr.mxu0 0.0
  %172 = vmatpush1.msra.mxu0 0.0
  %173 = vmatprep.subr.mxu0 0.0
  %174 = vmatpush1.msra.mxu0 0.0
  %175 = vmatprep.subr.mxu0 0.0
  %176 = vmatpush1.msra.mxu0 0.0
  %177 = vmatprep.subr.mxu0 0.0
  %178 = vmatpush1.msra.mxu0 0.0
  %179 = vmatprep.subr.mxu0 0.0
  %180 = vmatpush1.msra.mxu0 0.0
  %181 = vmatprep.subr.mxu0 0.0
  %182 = vmatpush1.msra.mxu0 0.0
  %183 = vmatprep.subr.mxu0 0.0
  %184 = vmatpush1.msra.mxu0 0.0
  %185 = vmatprep.subr.mxu0 0.0
  %186 = vmatpush1.msra.mxu0 0.0
  %187 = vmatprep.mubr.f32.mxu0 0.0
  %188 = vmatmul.mubr.f32.gmra.mrb[0].mxu0 %v114
  %v189 = vpop.f32.mrb[0].mxu0
  %v190 = vadd.f32 0.0, %v189
  %v191 = vpop.f32.mrb[0].mxu0
  %192 = vmatprep.mubr.f32.mxu0 0.0
  %193 = vmatmul.mubr.f32.gmra.mrb[0].mxu0 %v117
  %v194 = vpop.f32.mrb[0].mxu0
  %v195 = vadd.f32 0.0, %v194
  %v196 = vpop.f32.mrb[0].mxu0
  %197 = vdwg.mxu0
  %v199 = vsel %vm112, %v104, 0
  %v202 = vsel %vm112, %v109, 0
  %v205 = vsel %vm119, %v23, 0
  %207 = vmatprep.subr.mxu0 0.0
  %208 = vmatpush1.msra.mxu0 %v205
  %209 = vmatprep.subr.mxu0 0.0
  %210 = vmatpush1.msra.mxu0 0.0
  %211 = vmatprep.subr.mxu0 0.0
  %212 = vmatpush1.msra.mxu0 0.0
  %213 = vmatprep.subr.mxu0 0.0
  %214 = vmatpush1.msra.mxu0 0.0
  %215 = vmatprep.subr.mxu0 0.0
  %216 = vmatpush1.msra.mxu0 0.0
  %217 = vmatprep.subr.mxu0 0.0
  %218 = vmatpush1.msra.mxu0 0.0
  %219 = vmatprep.subr.mxu0 0.0
  %220 = vmatpush1.msra.mxu0 0.0
  %221 = vmatprep.subr.mxu0 0.0
  %222 = vmatpush1.msra.mxu0 0.0
  %223 = vmatprep.subr.mxu0 0.0
  %224 = vmatpush1.msra.mxu0 0.0
  %225 = vmatprep.subr.mxu0 0.0
  %226 = vmatpush1.msra.mxu0 0.0
  %227 = vmatprep.subr.mxu0 0.0
  %228 = vmatpush1.msra.mxu0 0.0
  %229 = vmatprep.subr.mxu0 0.0
  %230 = vmatpush1.msra.mxu0 0.0
  %231 = vmatprep.subr.mxu0 0.0
  %232 = vmatpush1.msra.mxu0 0.0
  %233 = vmatprep.subr.mxu0 0.0
  %234 = vmatpush1.msra.mxu0 0.0
  %235 = vmatprep.subr.mxu0 0.0
  %236 = vmatpush1.msra.mxu0 0.0
  %237 = vmatprep.subr.mxu0 0.0
  %238 = vmatpush1.msra.mxu0 0.0
  %239 = vmatprep.subr.mxu0 0.0
  %240 = vmatpush1.msra.mxu0 0.0
  %241 = vmatprep.subr.mxu0 0.0
  %242 = vmatpush1.msra.mxu0 0.0
  %243 = vmatprep.subr.mxu0 0.0
  %244 = vmatpush1.msra.mxu0 0.0
  %245 = vmatprep.subr.mxu0 0.0
  %246 = vmatpush1.msra.mxu0 0.0
  %247 = vmatprep.subr.mxu0 0.0
  %248 = vmatpush1.msra.mxu0 0.0
  %249 = vmatprep.subr.mxu0 0.0
  %250 = vmatpush1.msra.mxu0 0.0
  %251 = vmatprep.subr.mxu0 0.0
  %252 = vmatpush1.msra.mxu0 0.0
  %253 = vmatprep.subr.mxu0 0.0
  %254 = vmatpush1.msra.mxu0 0.0
  %255 = vmatprep.subr.mxu0 0.0
  %256 = vmatpush1.msra.mxu0 0.0
  %257 = vmatprep.subr.mxu0 0.0
  %258 = vmatpush1.msra.mxu0 0.0
  %259 = vmatprep.subr.mxu0 0.0
  %260 = vmatpush1.msra.mxu0 0.0
  %261 = vmatprep.subr.mxu0 0.0
  %262 = vmatpush1.msra.mxu0 0.0
  %263 = vmatprep.subr.mxu0 0.0
  %264 = vmatpush1.msra.mxu0 0.0
  %265 = vmatprep.subr.mxu0 0.0
  %266 = vmatpush1.msra.mxu0 0.0
  %267 = vmatprep.subr.mxu0 0.0
  %268 = vmatpush1.msra.mxu0 0.0
  %269 = vmatprep.subr.mxu0 0.0
  %270 = vmatpush1.msra.mxu0 0.0
  %271 = vmatprep.mubr.f32.mxu0 0.0
  %272 = vmatmul.mubr.f32.gmra.mrb[0].mxu0 %v199
  %v273 = vpop.f32.mrb[0].mxu0
  %v274 = vadd.f32 %v190, %v273
  %v275 = vpop.f32.mrb[0].mxu0
  %276 = vmatprep.mubr.f32.mxu0 0.0
  %277 = vmatmul.mubr.f32.gmra.mrb[0].mxu0 %v202
  %v278 = vpop.f32.mrb[0].mxu0
  %v279 = vadd.f32 %v195, %v278
  %v280 = vpop.f32.mrb[0].mxu0
  %281 = vdwg.mxu0
  %s282 = scalar_lea.vmem %s0, 16
  %v283 = vld [vmem:[%s282] sm:$0xff]
  %v284 = vld [vmem:[%s282 + $0x8] sm:$0xff]
  %s285 = sadd.s32 %s20, 16
  %s286 = scalar_lea.vmem %s0, %s285
  %v287 = vld [vmem:[%s286] sm:$0xff]
  %v288 = vld [vmem:[%s286 + $0x8] sm:$0xff]
  %289 = vmatprep.subr.mxu0 0.0
  %290 = vmatpush1.msra.mxu0 %v283
  %291 = vmatprep.subr.mxu0 0.0
  %292 = vmatpush1.msra.mxu0 %v284
  %293 = vmatprep.subr.mxu0 0.0
  %294 = vmatpush1.msra.mxu0 0.0
  %295 = vmatprep.subr.mxu0 0.0
  %296 = vmatpush1.msra.mxu0 0.0
  %297 = vmatprep.subr.mxu0 0.0
  %298 = vmatpush1.msra.mxu0 0.0
  %299 = vmatprep.subr.mxu0 0.0
  %300 = vmatpush1.msra.mxu0 0.0
  %301 = vmatprep.subr.mxu0 0.0
  %302 = vmatpush1.msra.mxu0 0.0
  %303 = vmatprep.subr.mxu0 0.0
  %304 = vmatpush1.msra.mxu0 0.0
  %305 = vmatprep.subr.mxu0 0.0
  %306 = vmatpush1.msra.mxu0 0.0
  %307 = vmatprep.subr.mxu0 0.0
  %308 = vmatpush1.msra.mxu0 0.0
  %309 = vmatprep.subr.mxu0 0.0
  %310 = vmatpush1.msra.mxu0 0.0
  %311 = vmatprep.subr.mxu0 0.0
  %312 = vmatpush1.msra.mxu0 0.0
  %313 = vmatprep.subr.mxu0 0.0
  %314 = vmatpush1.msra.mxu0 0.0
  %315 = vmatprep.subr.mxu0 0.0
  %316 = vmatpush1.msra.mxu0 0.0
  %317 = vmatprep.subr.mxu0 0.0
  %318 = vmatpush1.msra.mxu0 0.0
  %319 = vmatprep.subr.mxu0 0.0
  %320 = vmatpush1.msra.mxu0 0.0
  %321 = vmatprep.subr.mxu0 0.0
  %322 = vmatpush1.msra.mxu0 0.0
  %323 = vmatprep.subr.mxu0 0.0
  %324 = vmatpush1.msra.mxu0 0.0
  %325 = vmatprep.subr.mxu0 0.0
  %326 = vmatpush1.msra.mxu0 0.0
  %327 = vmatprep.subr.mxu0 0.0
  %328 = vmatpush1.msra.mxu0 0.0
  %329 = vmatprep.subr.mxu0 0.0
  %330 = vmatpush1.msra.mxu0 0.0
  %331 = vmatprep.subr.mxu0 0.0
  %332 = vmatpush1.msra.mxu0 0.0
  %333 = vmatprep.subr.mxu0 0.0
  %334 = vmatpush1.msra.mxu0 0.0
  %335 = vmatprep.subr.mxu0 0.0
  %336 = vmatpush1.msra.mxu0 0.0
  %337 = vmatprep.subr.mxu0 0.0
  %338 = vmatpush1.msra.mxu0 0.0
  %339 = vmatprep.subr.mxu0 0.0
  %340 = vmatpush1.msra.mxu0 0.0
  %341 = vmatprep.subr.mxu0 0.0
  %342 = vmatpush1.msra.mxu0 0.0
  %343 = vmatprep.subr.mxu0 0.0
  %344 = vmatpush1.msra.mxu0 0.0
  %345 = vmatprep.subr.mxu0 0.0
  %346 = vmatpush1.msra.mxu0 0.0
  %347 = vmatprep.subr.mxu0 0.0
  %348 = vmatpush1.msra.mxu0 0.0
  %349 = vmatprep.subr.mxu0 0.0
  %350 = vmatpush1.msra.mxu0 0.0
  %351 = vmatprep.subr.mxu0 0.0
  %352 = vmatpush1.msra.mxu0 0.0
  %353 = vmatprep.mubr.f32.mxu0 0.0
  %354 = vmatmul.mubr.f32.gmra.mrb[0].mxu0 %v32
  %v355 = vpop.f32.mrb[0].mxu0
  %v356 = vadd.f32 0.0, %v355
  %v357 = vpop.f32.mrb[0].mxu0
  %358 = vmatprep.mubr.f32.mxu0 0.0
  %359 = vmatmul.mubr.f32.gmra.mrb[0].mxu0 %v35
  %v360 = vpop.f32.mrb[0].mxu0
  %v361 = vadd.f32 0.0, %v360
  %v362 = vpop.f32.mrb[0].mxu0
  %363 = vdwg.mxu0
  %v365 = vsel %vm112, %v287, 0
  %v368 = vsel %vm112, %v288, 0
  %370 = vmatprep.subr.mxu0 0.0
  %371 = vmatpush1.msra.mxu0 %v121
  %372 = vmatprep.subr.mxu0 0.0
  %373 = vmatpush1.msra.mxu0 0.0
  %374 = vmatprep.subr.mxu0 0.0
  %375 = vmatpush1.msra.mxu0 0.0
  %376 = vmatprep.subr.mxu0 0.0
  %377 = vmatpush1.msra.mxu0 0.0
  %378 = vmatprep.subr.mxu0 0.0
  %379 = vmatpush1.msra.mxu0 0.0
  %380 = vmatprep.subr.mxu0 0.0
  %381 = vmatpush1.msra.mxu0 0.0
  %382 = vmatprep.subr.mxu0 0.0
  %383 = vmatpush1.msra.mxu0 0.0
  %384 = vmatprep.subr.mxu0 0.0
  %385 = vmatpush1.msra.mxu0 0.0
  %386 = vmatprep.subr.mxu0 0.0
  %387 = vmatpush1.msra.mxu0 0.0
  %388 = vmatprep.subr.mxu0 0.0
  %389 = vmatpush1.msra.mxu0 0.0
  %390 = vmatprep.subr.mxu0 0.0
  %391 = vmatpush1.msra.mxu0 0.0
  %392 = vmatprep.subr.mxu0 0.0
  %393 = vmatpush1.msra.mxu0 0.0
  %394 = vmatprep.subr.mxu0 0.0
  %395 = vmatpush1.msra.mxu0 0.0
  %396 = vmatprep.subr.mxu0 0.0
  %397 = vmatpush1.msra.mxu0 0.0
  %398 = vmatprep.subr.mxu0 0.0
  %399 = vmatpush1.msra.mxu0 0.0
  %400 = vmatprep.subr.mxu0 0.0
  %401 = vmatpush1.msra.mxu0 0.0
  %402 = vmatprep.subr.mxu0 0.0
  %403 = vmatpush1.msra.mxu0 0.0
  %404 = vmatprep.subr.mxu0 0.0
  %405 = vmatpush1.msra.mxu0 0.0
  %406 = vmatprep.subr.mxu0 0.0
  %407 = vmatpush1.msra.mxu0 0.0
  %408 = vmatprep.subr.mxu0 0.0
  %409 = vmatpush1.msra.mxu0 0.0
  %410 = vmatprep.subr.mxu0 0.0
  %411 = vmatpush1.msra.mxu0 0.0
  %412 = vmatprep.subr.mxu0 0.0
  %413 = vmatpush1.msra.mxu0 0.0
  %414 = vmatprep.subr.mxu0 0.0
  %415 = vmatpush1.msra.mxu0 0.0
  %416 = vmatprep.subr.mxu0 0.0
  %417 = vmatpush1.msra.mxu0 0.0
  %418 = vmatprep.subr.mxu0 0.0
  %419 = vmatpush1.msra.mxu0 0.0
  %420 = vmatprep.subr.mxu0 0.0
  %421 = vmatpush1.msra.mxu0 0.0
  %422 = vmatprep.subr.mxu0 0.0
  %423 = vmatpush1.msra.mxu0 0.0
  %424 = vmatprep.subr.mxu0 0.0
  %425 = vmatpush1.msra.mxu0 0.0
  %426 = vmatprep.subr.mxu0 0.0
  %427 = vmatpush1.msra.mxu0 0.0
  %428 = vmatprep.subr.mxu0 0.0
  %429 = vmatpush1.msra.mxu0 0.0
  %430 = vmatprep.subr.mxu0 0.0
  %431 = vmatpush1.msra.mxu0 0.0
  %432 = vmatprep.subr.mxu0 0.0
  %433 = vmatpush1.msra.mxu0 0.0
  %434 = vmatprep.mubr.f32.mxu0 0.0
  %435 = vmatmul.mubr.f32.gmra.mrb[0].mxu0 %v365
  %v436 = vpop.f32.mrb[0].mxu0
  %v437 = vadd.f32 0.0, %v436
  %v438 = vpop.f32.mrb[0].mxu0
  %439 = vmatprep.mubr.f32.mxu0 0.0
  %440 = vmatmul.mubr.f32.gmra.mrb[0].mxu0 %v368
  %v441 = vpop.f32.mrb[0].mxu0
  %v442 = vadd.f32 0.0, %v441
  %v443 = vpop.f32.mrb[0].mxu0
  %444 = vdwg.mxu0
  %v446 = vsel %vm112, %v356, 0
  %v449 = vsel %vm112, %v361, 0
  %451 = vmatprep.subr.mxu0 0.0
  %452 = vmatpush1.msra.mxu0 %v205
  %453 = vmatprep.subr.mxu0 0.0
  %454 = vmatpush1.msra.mxu0 0.0
  %455 = vmatprep.subr.mxu0 0.0
  %456 = vmatpush1.msra.mxu0 0.0
  %457 = vmatprep.subr.mxu0 0.0
  %458 = vmatpush1.msra.mxu0 0.0
  %459 = vmatprep.subr.mxu0 0.0
  %460 = vmatpush1.msra.mxu0 0.0
  %461 = vmatprep.subr.mxu0 0.0
  %462 = vmatpush1.msra.mxu0 0.0
  %463 = vmatprep.subr.mxu0 0.0
  %464 = vmatpush1.msra.mxu0 0.0
  %465 = vmatprep.subr.mxu0 0.0
  %466 = vmatpush1.msra.mxu0 0.0
  %467 = vmatprep.subr.mxu0 0.0
  %468 = vmatpush1.msra.mxu0 0.0
  %469 = vmatprep.subr.mxu0 0.0
  %470 = vmatpush1.msra.mxu0 0.0
  %471 = vmatprep.subr.mxu0 0.0
  %472 = vmatpush1.msra.mxu0 0.0
  %473 = vmatprep.subr.mxu0 0.0
  %474 = vmatpush1.msra.mxu0 0.0
  %475 = vmatprep.subr.mxu0 0.0
  %476 = vmatpush1.msra.mxu0 0.0
  %477 = vmatprep.subr.mxu0 0.0
  %478 = vmatpush1.msra.mxu0 0.0
  %479 = vmatprep.subr.mxu0 0.0
  %480 = vmatpush1.msra.mxu0 0.0
  %481 = vmatprep.subr.mxu0 0.0
  %482 = vmatpush1.msra.mxu0 0.0
  %483 = vmatprep.subr.mxu0 0.0
  %484 = vmatpush1.msra.mxu0 0.0
  %485 = vmatprep.subr.mxu0 0.0
  %486 = vmatpush1.msra.mxu0 0.0
  %487 = vmatprep.subr.mxu0 0.0
  %488 = vmatpush1.msra.mxu0 0.0
  %489 = vmatprep.subr.mxu0 0.0
  %490 = vmatpush1.msra.mxu0 0.0
  %491 = vmatprep.subr.mxu0 0.0
  %492 = vmatpush1.msra.mxu0 0.0
  %493 = vmatprep.subr.mxu0 0.0
  %494 = vmatpush1.msra.mxu0 0.0
  %495 = vmatprep.subr.mxu0 0.0
  %496 = vmatpush1.msra.mxu0 0.0
  %497 = vmatprep.subr.mxu0 0.0
  %498 = vmatpush1.msra.mxu0 0.0
  %499 = vmatprep.subr.mxu0 0.0
  %500 = vmatpush1.msra.mxu0 0.0
  %501 = vmatprep.subr.mxu0 0.0
  %502 = vmatpush1.msra.mxu0 0.0
  %503 = vmatprep.subr.mxu0 0.0
  %504 = vmatpush1.msra.mxu0 0.0
  %505 = vmatprep.subr.mxu0 0.0
  %506 = vmatpush1.msra.mxu0 0.0
  %507 = vmatprep.subr.mxu0 0.0
  %508 = vmatpush1.msra.mxu0 0.0
  %509 = vmatprep.subr.mxu0 0.0
  %510 = vmatpush1.msra.mxu0 0.0
  %511 = vmatprep.subr.mxu0 0.0
  %512 = vmatpush1.msra.mxu0 0.0
  %513 = vmatprep.subr.mxu0 0.0
  %514 = vmatpush1.msra.mxu0 0.0
  %515 = vmatprep.mubr.f32.mxu0 0.0
  %516 = vmatmul.mubr.f32.gmra.mrb[0].mxu0 %v446
  %v517 = vpop.f32.mrb[0].mxu0
  %v518 = vadd.f32 %v437, %v517
  %v519 = vpop.f32.mrb[0].mxu0
  %520 = vmatprep.mubr.f32.mxu0 0.0
  %521 = vmatmul.mubr.f32.gmra.mrb[0].mxu0 %v449
  %v522 = vpop.f32.mrb[0].mxu0
  %v523 = vadd.f32 %v442, %v522
  %v524 = vpop.f32.mrb[0].mxu0
  %525 = vdwg.mxu0
  %s526 = scalar_lea.vmem %s0, 32
  %v527 = vld [vmem:[%s526] sm:$0xff]
  %v528 = vld [vmem:[%s526 + $0x8] sm:$0xff]
  %s529 = sadd.s32 %s20, 32
  %s530 = scalar_lea.vmem %s0, %s529
  %v531 = vld [vmem:[%s530] sm:$0xff]
  %v532 = vld [vmem:[%s530 + $0x8] sm:$0xff]
  %533 = vmatprep.subr.mxu0 0.0
  %534 = vmatpush1.msra.mxu0 %v527
  %535 = vmatprep.subr.mxu0 0.0
  %536 = vmatpush1.msra.mxu0 %v528
  %537 = vmatprep.subr.mxu0 0.0
  %538 = vmatpush1.msra.mxu0 0.0
  %539 = vmatprep.subr.mxu0 0.0
  %540 = vmatpush1.msra.mxu0 0.0
  %541 = vmatprep.subr.mxu0 0.0
  %542 = vmatpush1.msra.mxu0 0.0
  %543 = vmatprep.subr.mxu0 0.0
  %544 = vmatpush1.msra.mxu0 0.0
  %545 = vmatprep.subr.mxu0 0.0
  %546 = vmatpush1.msra.mxu0 0.0
  %547 = vmatprep.subr.mxu0 0.0
  %548 = vmatpush1.msra.mxu0 0.0
  %549 = vmatprep.subr.mxu0 0.0
  %550 = vmatpush1.msra.mxu0 0.0
  %551 = vmatprep.subr.mxu0 0.0
  %552 = vmatpush1.msra.mxu0 0.0
  %553 = vmatprep.subr.mxu0 0.0
  %554 = vmatpush1.msra.mxu0 0.0
  %555 = vmatprep.subr.mxu0 0.0
  %556 = vmatpush1.msra.mxu0 0.0
  %557 = vmatprep.subr.mxu0 0.0
  %558 = vmatpush1.msra.mxu0 0.0
  %559 = vmatprep.subr.mxu0 0.0
  %560 = vmatpush1.msra.mxu0 0.0
  %561 = vmatprep.subr.mxu0 0.0
  %562 = vmatpush1.msra.mxu0 0.0
  %563 = vmatprep.subr.mxu0 0.0
  %564 = vmatpush1.msra.mxu0 0.0
  %565 = vmatprep.subr.mxu0 0.0
  %566 = vmatpush1.msra.mxu0 0.0
  %567 = vmatprep.subr.mxu0 0.0
  %568 = vmatpush1.msra.mxu0 0.0
  %569 = vmatprep.subr.mxu0 0.0
  %570 = vmatpush1.msra.mxu0 0.0
  %571 = vmatprep.subr.mxu0 0.0
  %572 = vmatpush1.msra.mxu0 0.0
  %573 = vmatprep.subr.mxu0 0.0
  %574 = vmatpush1.msra.mxu0 0.0
  %575 = vmatprep.subr.mxu0 0.0
  %576 = vmatpush1.msra.mxu0 0.0
  %577 = vmatprep.subr.mxu0 0.0
  %578 = vmatpush1.msra.mxu0 0.0
  %579 = vmatprep.subr.mxu0 0.0
  %580 = vmatpush1.msra.mxu0 0.0
  %581 = vmatprep.subr.mxu0 0.0
  %582 = vmatpush1.msra.mxu0 0.0
  %583 = vmatprep.subr.mxu0 0.0
  %584 = vmatpush1.msra.mxu0 0.0
  %585 = vmatprep.subr.mxu0 0.0
  %586 = vmatpush1.msra.mxu0 0.0
  %587 = vmatprep.subr.mxu0 0.0
  %588 = vmatpush1.msra.mxu0 0.0
  %589 = vmatprep.subr.mxu0 0.0
  %590 = vmatpush1.msra.mxu0 0.0
  %591 = vmatprep.subr.mxu0 0.0
  %592 = vmatpush1.msra.mxu0 0.0
  %593 = vmatprep.subr.mxu0 0.0
  %594 = vmatpush1.msra.mxu0 0.0
  %595 = vmatprep.subr.mxu0 0.0
  %596 = vmatpush1.msra.mxu0 0.0
  %597 = vmatprep.mubr.f32.mxu0 0.0
  %598 = vmatmul.mubr.f32.gmra.mrb[0].mxu0 %v32
  %v599 = vpop.f32.mrb[0].mxu0
  %v600 = vadd.f32 0.0, %v599
  %v601 = vpop.f32.mrb[0].mxu0
  %602 = vmatprep.mubr.f32.mxu0 0.0
  %603 = vmatmul.mubr.f32.gmra.mrb[0].mxu0 %v35
  %v604 = vpop.f32.mrb[0].mxu0
  %v605 = vadd.f32 0.0, %v604
  %v606 = vpop.f32.mrb[0].mxu0
  %607 = vdwg.mxu0
  %v609 = vsel %vm112, %v531, 0
  %v612 = vsel %vm112, %v532, 0
  %614 = vmatprep.subr.mxu0 0.0
  %615 = vmatpush1.msra.mxu0 %v121
  %616 = vmatprep.subr.mxu0 0.0
  %617 = vmatpush1.msra.mxu0 0.0
  %618 = vmatprep.subr.mxu0 0.0
  %619 = vmatpush1.msra.mxu0 0.0
  %620 = vmatprep.subr.mxu0 0.0
  %621 = vmatpush1.msra.mxu0 0.0
  %622 = vmatprep.subr.mxu0 0.0
  %623 = vmatpush1.msra.mxu0 0.0
  %624 = vmatprep.subr.mxu0 0.0
  %625 = vmatpush1.msra.mxu0 0.0
  %626 = vmatprep.subr.mxu0 0.0
  %627 = vmatpush1.msra.mxu0 0.0
  %628 = vmatprep.subr.mxu0 0.0
  %629 = vmatpush1.msra.mxu0 0.0
  %630 = vmatprep.subr.mxu0 0.0
  %631 = vmatpush1.msra.mxu0 0.0
  %632 = vmatprep.subr.mxu0 0.0
  %633 = vmatpush1.msra.mxu0 0.0
  %634 = vmatprep.subr.mxu0 0.0
  %635 = vmatpush1.msra.mxu0 0.0
  %636 = vmatprep.subr.mxu0 0.0
  %637 = vmatpush1.msra.mxu0 0.0
  %638 = vmatprep.subr.mxu0 0.0
  %639 = vmatpush1.msra.mxu0 0.0
  %640 = vmatprep.subr.mxu0 0.0
  %641 = vmatpush1.msra.mxu0 0.0
  %642 = vmatprep.subr.mxu0 0.0
  %643 = vmatpush1.msra.mxu0 0.0
  %644 = vmatprep.subr.mxu0 0.0
  %645 = vmatpush1.msra.mxu0 0.0
  %646 = vmatprep.subr.mxu0 0.0
  %647 = vmatpush1.msra.mxu0 0.0
  %648 = vmatprep.subr.mxu0 0.0
  %649 = vmatpush1.msra.mxu0 0.0
  %650 = vmatprep.subr.mxu0 0.0
  %651 = vmatpush1.msra.mxu0 0.0
  %652 = vmatprep.subr.mxu0 0.0
  %653 = vmatpush1.msra.mxu0 0.0
  %654 = vmatprep.subr.mxu0 0.0
  %655 = vmatpush1.msra.mxu0 0.0
  %656 = vmatprep.subr.mxu0 0.0
  %657 = vmatpush1.msra.mxu0 0.0
  %658 = vmatprep.subr.mxu0 0.0
  %659 = vmatpush1.msra.mxu0 0.0
  %660 = vmatprep.subr.mxu0 0.0
  %661 = vmatpush1.msra.mxu0 0.0
  %662 = vmatprep.subr.mxu0 0.0
  %663 = vmatpush1.msra.mxu0 0.0
  %664 = vmatprep.subr.mxu0 0.0
  %665 = vmatpush1.msra.mxu0 0.0
  %666 = vmatprep.subr.mxu0 0.0
  %667 = vmatpush1.msra.mxu0 0.0
  %668 = vmatprep.subr.mxu0 0.0
  %669 = vmatpush1.msra.mxu0 0.0
  %670 = vmatprep.subr.mxu0 0.0
  %671 = vmatpush1.msra.mxu0 0.0
  %672 = vmatprep.subr.mxu0 0.0
  %673 = vmatpush1.msra.mxu0 0.0
  %674 = vmatprep.subr.mxu0 0.0
  %675 = vmatpush1.msra.mxu0 0.0
  %676 = vmatprep.subr.mxu0 0.0
  %677 = vmatpush1.msra.mxu0 0.0
  %678 = vmatprep.mubr.f32.mxu0 0.0
  %679 = vmatmul.mubr.f32.gmra.mrb[0].mxu0 %v609
  %v680 = vpop.f32.mrb[0].mxu0
  %v681 = vadd.f32 0.0, %v680
  %v682 = vpop.f32.mrb[0].mxu0
  %683 = vmatprep.mubr.f32.mxu0 0.0
  %684 = vmatmul.mubr.f32.gmra.mrb[0].mxu0 %v612
  %v685 = vpop.f32.mrb[0].mxu0
  %v686 = vadd.f32 0.0, %v685
  %v687 = vpop.f32.mrb[0].mxu0
  %688 = vdwg.mxu0
  %v690 = vsel %vm112, %v600, 0
  %v693 = vsel %vm112, %v605, 0
  %695 = vmatprep.subr.mxu0 0.0
  %696 = vmatpush1.msra.mxu0 %v205
  %697 = vmatprep.subr.mxu0 0.0
  %698 = vmatpush1.msra.mxu0 0.0
  %699 = vmatprep.subr.mxu0 0.0
  %700 = vmatpush1.msra.mxu0 0.0
  %701 = vmatprep.subr.mxu0 0.0
  %702 = vmatpush1.msra.mxu0 0.0
  %703 = vmatprep.subr.mxu0 0.0
  %704 = vmatpush1.msra.mxu0 0.0
  %705 = vmatprep.subr.mxu0 0.0
  %706 = vmatpush1.msra.mxu0 0.0
  %707 = vmatprep.subr.mxu0 0.0
  %708 = vmatpush1.msra.mxu0 0.0
  %709 = vmatprep.subr.mxu0 0.0
  %710 = vmatpush1.msra.mxu0 0.0
  %711 = vmatprep.subr.mxu0 0.0
  %712 = vmatpush1.msra.mxu0 0.0
  %713 = vmatprep.subr.mxu0 0.0
  %714 = vmatpush1.msra.mxu0 0.0
  %715 = vmatprep.subr.mxu0 0.0
  %716 = vmatpush1.msra.mxu0 0.0
  %717 = vmatprep.subr.mxu0 0.0
  %718 = vmatpush1.msra.mxu0 0.0
  %719 = vmatprep.subr.mxu0 0.0
  %720 = vmatpush1.msra.mxu0 0.0
  %721 = vmatprep.subr.mxu0 0.0
  %722 = vmatpush1.msra.mxu0 0.0
  %723 = vmatprep.subr.mxu0 0.0
  %724 = vmatpush1.msra.mxu0 0.0
  %725 = vmatprep.subr.mxu0 0.0
  %726 = vmatpush1.msra.mxu0 0.0
  %727 = vmatprep.subr.mxu0 0.0
  %728 = vmatpush1.msra.mxu0 0.0
  %729 = vmatprep.subr.mxu0 0.0
  %730 = vmatpush1.msra.mxu0 0.0
  %731 = vmatprep.subr.mxu0 0.0
  %732 = vmatpush1.msra.mxu0 0.0
  %733 = vmatprep.subr.mxu0 0.0
  %734 = vmatpush1.msra.mxu0 0.0
  %735 = vmatprep.subr.mxu0 0.0
  %736 = vmatpush1.msra.mxu0 0.0
  %737 = vmatprep.subr.mxu0 0.0
  %738 = vmatpush1.msra.mxu0 0.0
  %739 = vmatprep.subr.mxu0 0.0
  %740 = vmatpush1.msra.mxu0 0.0
  %741 = vmatprep.subr.mxu0 0.0
  %742 = vmatpush1.msra.mxu0 0.0
  %743 = vmatprep.subr.mxu0 0.0
  %744 = vmatpush1.msra.mxu0 0.0
  %745 = vmatprep.subr.mxu0 0.0
  %746 = vmatpush1.msra.mxu0 0.0
  %747 = vmatprep.subr.mxu0 0.0
  %748 = vmatpush1.msra.mxu0 0.0
  %749 = vmatprep.subr.mxu0 0.0
  %750 = vmatpush1.msra.mxu0 0.0
  %751 = vmatprep.subr.mxu0 0.0
  %752 = vmatpush1.msra.mxu0 0.0
  %753 = vmatprep.subr.mxu0 0.0
  %754 = vmatpush1.msra.mxu0 0.0
  %755 = vmatprep.subr.mxu0 0.0
  %756 = vmatpush1.msra.mxu0 0.0
  %757 = vmatprep.subr.mxu0 0.0
  %758 = vmatpush1.msra.mxu0 0.0
  %759 = vmatprep.mubr.f32.mxu0 0.0
  %760 = vmatmul.mubr.f32.gmra.mrb[0].mxu0 %v690
  %v761 = vpop.f32.mrb[0].mxu0
  %v762 = vadd.f32 %v681, %v761
  %v763 = vpop.f32.mrb[0].mxu0
  %764 = vmatprep.mubr.f32.mxu0 0.0
  %765 = vmatmul.mubr.f32.gmra.mrb[0].mxu0 %v693
  %v766 = vpop.f32.mrb[0].mxu0
  %v767 = vadd.f32 %v686, %v766
  %v768 = vpop.f32.mrb[0].mxu0
  %769 = vdwg.mxu0
  %v770 = vmul.f32 %v274, %v274
  %v771 = vmul.f32 %v279, %v279
  %v772 = vmul.f32 %v518, %v518
  %v773 = vmul.f32 %v523, %v523
  %v774 = vadd.f32 %v770, %v772
  %v775 = vadd.f32 %v771, %v773
  %v776 = vmul.f32 %v762, %v762
  %v777 = vmul.f32 %v767, %v767
  %v778 = vadd.f32 %v774, %v776
  %v779 = vadd.f32 %v775, %v777
  %v780 = vadd.f32 %v778, 1e-12
  %v781 = vadd.f32 %v779, 1e-12
  %v782 = vrsqrt.pop %v780
  %v783 = vrsqrt.pop %v781
  %v784 = vmul.f32 %v778, %v782
  %v785 = vmul.f32 %v779, %v783
  %v786 = vld [vmem:[%s4] sm:$0x1]
  %v788 = vlaneseq
  %v789 = vshrl.u32 %v788, 7
  %v790 = vsub.s32 0, %v789
  %v791 = vrot.slane %v786, %v790
  %v793 = vadd.f32 %v784, %v791
  %v794 = vadd.f32 %v785, %v791
  %v795 = vmax.f32 %v793, 0.0
  %v796 = vmax.f32 %v794, 0.0
  %v797 = vmul.f32 %v795, %v782
  %v798 = vmul.f32 %v796, %v783
  %v799 = vmul.f32 %v274, %v797
  %v800 = vmul.f32 %v279, %v798
  %vm801 = vcmask 31744
  %802 = vst.msk [vmem:[%s5] sm:$0xff] %vm801, %v799
  %803 = vst.msk [vmem:[%s5 + $0x8] sm:$0xff] %vm801, %v800
  %v804 = vmul.f32 %v518, %v797
  %v805 = vmul.f32 %v523, %v798
  %s806 = scalar_lea.vmem %s5, 16
  %807 = vst.msk [vmem:[%s806] sm:$0xff] %vm801, %v804
  %808 = vst.msk [vmem:[%s806 + $0x8] sm:$0xff] %vm801, %v805
  %v809 = vmul.f32 %v762, %v797
  %v810 = vmul.f32 %v767, %v798
  %s811 = scalar_lea.vmem %s5, 32
  %812 = vst.msk [vmem:[%s811] sm:$0xff] %vm801, %v809
  %813 = vst.msk [vmem:[%s811 + $0x8] sm:$0xff] %vm801, %v810
  // Predicated region
  $region22: #{tpu_custom_call.1} parent=0 // pred_check
    _
  $region23: #{tpu_custom_call.1} parent=0 // pred_check_branch
    %815 = sbr.rel (0) target = $region25
  $region24: #{tpu_custom_call.1} parent=0 // pred_region
    _
  $region25: #{tpu_custom_call.1} parent=0 // pred_fallthru
    _
  // Predicated region
  $region26: #{tpu_custom_call.1} parent=0 // pred_check
    _
  $region27: #{tpu_custom_call.1} parent=0 // pred_check_branch
    %817 = sbr.rel (0) target = $region29
  $region28: #{tpu_custom_call.1} parent=0 // pred_region
    _
  $region29: #{tpu_custom_call.1} parent=0 // pred_fallthru
    _

</llo_original>
